<compile_context>
chip_gen: v6e
topology: v6e:2x2x1
jax: 0.10.0
libtpu: 0.0.40
codegen_flags: <defaults>
</compile_context>

<pallas_src>
import jax
import jax.numpy as jnp
from jax.experimental import pallas as pl
from jax.experimental.pallas import tpu as pltpu


def _round_up(x, m):
    return (x + m - 1) // m * m


def qkv_kernel(x_ref, w_ref, b_ref, o_ref, acc_ref):
    # x_ref: [tm, tk] (bf16), w_ref: [tk, tn] (bf16), b_ref: [1, tn] (f32)
    # o_ref: [tm, tn] (input dtype), acc_ref: [tm, tn] f32 scratch
    k = pl.program_id(2)

    @pl.when(k == 0)
    def _():
        acc_ref[...] = jnp.zeros_like(acc_ref)

    acc_ref[...] += jnp.dot(
        x_ref[...], w_ref[...], preferred_element_type=jnp.float32
    )

    @pl.when(k == pl.num_programs(2) - 1)
    def _():
        o_ref[...] = (acc_ref[...] + b_ref[...]).astype(o_ref.dtype)


def qkv_projection(x, w, b, *, tm=256, tn=512, tk=512,
                   compute_dtype=jnp.bfloat16):
    """x: [M, K], w: [K, N], b: [N] -> [M, N] = x @ w + b (f32 accumulate)."""
    M, K = x.shape
    K2, N = w.shape
    assert K == K2

    # Adaptive tiles: shrink to the (padded) full dims for small problems,
    # otherwise use large MXU-friendly tiles and pad the arrays to multiples.
    if M <= tm:
        M_pad = _round_up(M, 8)
        tm = M_pad
    else:
        M_pad = _round_up(M, tm)
    if N <= tn:
        N_pad = _round_up(N, 128)          # lane-dense output stores
        tn = N_pad
    else:
        N_pad = _round_up(N, tn)
    if K <= tk:
        K_pad = K                          # full-dim block: no (8,128) constraint
        tk = K
    else:
        K_pad = _round_up(K, tk)

    xd = x.astype(compute_dtype)
    wd = w.astype(compute_dtype)
    bd = b.reshape(1, -1).astype(jnp.float32)
    if (M_pad, K_pad) != (M, K):
        xd = jnp.pad(xd, ((0, M_pad - M), (0, K_pad - K)))
    if (K_pad, N_pad) != (K, N):
        wd = jnp.pad(wd, ((0, K_pad - K), (0, N_pad - N)))
    if N_pad != N:
        bd = jnp.pad(bd, ((0, 0), (0, N_pad - N)))

    grid = (M_pad // tm, N_pad // tn, K_pad // tk)

    out = pl.pallas_call(
        qkv_kernel,
        out_shape=jax.ShapeDtypeStruct((M_pad, N_pad), x.dtype),
        grid_spec=pltpu.PrefetchScalarGridSpec(
            num_scalar_prefetch=0,
            grid=grid,
            in_specs=[
                pl.BlockSpec((tm, tk), lambda i, j, k: (i, k)),  # activations
                pl.BlockSpec((tk, tn), lambda i, j, k: (k, j)),  # weight tile
                pl.BlockSpec((1, tn), lambda i, j, k: (0, j)),   # bias tile
            ],
            out_specs=pl.BlockSpec((tm, tn), lambda i, j, k: (i, j)),
            scratch_shapes=[pltpu.VMEM((tm, tn), jnp.float32)],
        ),
        compiler_params=pltpu.CompilerParams(
            dimension_semantics=("parallel", "parallel", "arbitrary"),
            vmem_limit_bytes=32 * 1024 * 1024,
        ),
    )(xd, wd, bd)

    if (M_pad, N_pad) != (M, N):
        out = out[:M, :N]
    return out


def sparse_attention_forward(hidden_states, attention_mask, params):
    """hidden_states: [S, B, H]; attention_mask unused by the reference forward."""
    del attention_mask  # never read in the reference forward
    S, B, H = hidden_states.shape
    w_qkv, b_qkv = params["w_qkv"], params["b_qkv"]        # [H, 3H], [3H]

    # No input permute: the QKV matmul is row-wise, so flatten [S, B, H] as-is
    # and fold the (b, s) ordering into the output reshape (saves a full HBM
    # read+write pass over the activations vs materializing the permute).
    x = hidden_states.reshape(S * B, H)

    mixed = qkv_projection(x, w_qkv, b_qkv)                # [S*B, 3H]
    mixed = mixed.reshape(S, B, 3 * H)

    # [S, B, 3H] -> [B, 3H, S]: identical to the reference's permute(1,0,2)
    # followed by transpose(1,2), but with a single layout pass.
    # TODO(synk): if the (undefined) Sddmm/Spmm consumer can take [B, S, 3H],
    # drop this transpose entirely.
    mixed_x_layer = jnp.transpose(mixed, (1, 2, 0))
    return mixed_x_layer


def init_params(key, hidden_size):
    k1, k2 = jax.random.split(key)
    bound = 1.0 / (hidden_size ** 0.5)
    # torch nn.Linear(hidden, 3*hidden): weight [3H, H]; we store its transpose.
    w_qkv = jax.random.uniform(
        k1, (hidden_size, 3 * hidden_size), jnp.float32, -bound, bound)
    b_qkv = jax.random.uniform(
        k2, (3 * hidden_size,), jnp.float32, -bound, bound)
    return {"w_qkv": w_qkv, "b_qkv": b_qkv}


if __name__ == "__main__":
    hidden_size = 32
    num_attention_heads = 4
    seq, batch = 8, 2

    key = jax.random.PRNGKey(0)
    kx, kp = jax.random.split(key)

    hidden_states = jax.random.normal(kx, (seq, batch, hidden_size), jnp.float32)
    attention_mask = jnp.zeros((batch, 1, seq, seq), jnp.float32)
    params = init_params(kp, hidden_size)

    fwd = jax.jit(sparse_attention_forward)
    out = fwd(hidden_states, attention_mask, params)
    out = jax.block_until_ready(out)

    # sanity check against plain JAX f32 reference (bf16 MXU operands ->
    # loose-ish tolerance)
    x_ref = jnp.transpose(hidden_states, (1, 0, 2))        # [B, S, H]
    ref = jnp.transpose(x_ref @ params["w_qkv"] + params["b_qkv"], (0, 2, 1))
    assert out.shape == (batch, 3 * hidden_size, seq)
    assert jnp.allclose(out, ref, atol=5e-2, rtol=5e-2), "mismatch vs reference"

    print("KERNEL_OK")
</pallas_src>

<mosaic_0001>
module attributes {stable_mosaic.version = 11 : i64} {
  func.func @qkv_kernel(%arg0: i32, %arg1: i32, %arg2: i32, %arg3: memref<16x32xbf16, #tpu.memory_space<vmem>>, %arg4: memref<32x128xbf16, #tpu.memory_space<vmem>>, %arg5: memref<1x128xf32, #tpu.memory_space<vmem>>, %arg6: memref<16x128xf32, #tpu.memory_space<vmem>>, %arg7: memref<16x128xf32, #tpu.memory_space<vmem>>) attributes {dimension_semantics = [#tpu.dimension_semantics<parallel>, #tpu.dimension_semantics<parallel>, #tpu.dimension_semantics<arbitrary>], iteration_bounds = array<i64: 1, 1, 1>, scalar_prefetch = 0 : i64, scratch_operands = 1 : i64, tpu.core_type = #tpu.core_type<tc>, window_params = [{transform_indices = @transform_0, window_bounds = array<i64: 16, 32>}, {transform_indices = @transform_1, window_bounds = array<i64: 32, 128>}, {transform_indices = @transform_2, window_bounds = array<i64: 1, 128>}, {transform_indices = @transform_3, window_bounds = array<i64: 16, 128>}]} {
    %c0_i32 = arith.constant 0 : i32
    %0 = arith.cmpi eq, %arg2, %c0_i32 : i32
    %1 = arith.extui %0 : i1 to i32
    %c0_i32_0 = arith.constant 0 : i32
    %2 = arith.cmpi ne, %1, %c0_i32_0 : i32
    scf.if %2 {
      %cst_10 = arith.constant 0.000000e+00 : f32
      %12 = vector.broadcast %cst_10 : f32 to vector<16x128xf32>
      %c0_11 = arith.constant 0 : index
      %c0_12 = arith.constant 0 : index
      %13 = vector.load %arg7[%c0_11, %c0_12] : memref<16x128xf32, #tpu.memory_space<vmem>>, vector<16x128xf32>
      tpu.vector_store %arg7[%c0_11, %c0_12], %12 {strides = array<i32>} : memref<16x128xf32, #tpu.memory_space<vmem>>, vector<16x128xf32>,
    } else {
    }
    %c0 = arith.constant 0 : index
    %c0_1 = arith.constant 0 : index
    %3 = vector.load %arg7[%c0, %c0_1] : memref<16x128xf32, #tpu.memory_space<vmem>>, vector<16x128xf32>
    %c0_2 = arith.constant 0 : index
    %c0_3 = arith.constant 0 : index
    %4 = vector.load %arg3[%c0_2, %c0_3] : memref<16x32xbf16, #tpu.memory_space<vmem>>, vector<16x32xbf16>
    %c0_4 = arith.constant 0 : index
    %c0_5 = arith.constant 0 : index
    %5 = vector.load %arg4[%c0_4, %c0_5] : memref<32x128xbf16, #tpu.memory_space<vmem>>, vector<32x128xbf16>
    %cst = arith.constant dense<0.000000e+00> : vector<16x128xf32>
    %6 = tpu.matmul %4, %5, %cst {dimension_numbers = #tpu.dot_dimension_numbers<[1], [0], [0], [1], [0, 0, 1, 1], [], []>} : vector<16x32xbf16>, vector<32x128xbf16>, vector<16x128xf32> -> vector<16x128xf32>
    %7 = arith.addf %3, %6 : vector<16x128xf32>
    %c0_6 = arith.constant 0 : index
    %c0_7 = arith.constant 0 : index
    %8 = vector.load %arg7[%c0_6, %c0_7] : memref<16x128xf32, #tpu.memory_space<vmem>>, vector<16x128xf32>
    tpu.vector_store %arg7[%c0_6, %c0_7], %7 {strides = array<i32>} : memref<16x128xf32, #tpu.memory_space<vmem>>, vector<16x128xf32>,
    %c0_i32_8 = arith.constant 0 : i32
    %9 = arith.cmpi eq, %arg2, %c0_i32_8 : i32
    %10 = arith.extui %9 : i1 to i32
    %c0_i32_9 = arith.constant 0 : i32
    %11 = arith.cmpi ne, %10, %c0_i32_9 : i32
    scf.if %11 {
      %c0_10 = arith.constant 0 : index
      %c0_11 = arith.constant 0 : index
      %12 = vector.load %arg7[%c0_10, %c0_11] : memref<16x128xf32, #tpu.memory_space<vmem>>, vector<16x128xf32>
      %c0_12 = arith.constant 0 : index
      %c0_13 = arith.constant 0 : index
      %13 = vector.load %arg5[%c0_12, %c0_13] : memref<1x128xf32, #tpu.memory_space<vmem>>, vector<1x128xf32>
      %14 = vector.broadcast %13 : vector<1x128xf32> to vector<16x128xf32>
      %15 = arith.addf %12, %14 : vector<16x128xf32>
      %c0_14 = arith.constant 0 : index
      %c0_15 = arith.constant 0 : index
      %16 = vector.load %arg6[%c0_14, %c0_15] : memref<16x128xf32, #tpu.memory_space<vmem>>, vector<16x128xf32>
      tpu.vector_store %arg6[%c0_14, %c0_15], %15 {strides = array<i32>} : memref<16x128xf32, #tpu.memory_space<vmem>>, vector<16x128xf32>,
    } else {
    }
    return
  }
  func.func @transform_0(%arg0: i32, %arg1: i32, %arg2: i32) -> (i32, i32) {
    %c0_i32 = arith.constant 0 : i32
    return %arg0, %arg2 : i32, i32
  }
  func.func @transform_1(%arg0: i32, %arg1: i32, %arg2: i32) -> (i32, i32) {
    %c0_i32 = arith.constant 0 : i32
    return %arg2, %arg1 : i32, i32
  }
  func.func @transform_2(%arg0: i32, %arg1: i32, %arg2: i32) -> (i32, i32) {
    %c0_i32 = arith.constant 0 : i32
    %c0_i32_0 = arith.constant 0 : i32
    return %c0_i32, %arg1 : i32, i32
  }
  func.func @transform_3(%arg0: i32, %arg1: i32, %arg2: i32) -> (i32, i32) {
    %c0_i32 = arith.constant 0 : i32
    return %arg0, %arg1 : i32, i32
  }
}

</mosaic_0001>

<llo_original>
// kernel: sparse_attention_forward.1
$region0: #{sparse_attention_forward.1}
  #allocation0 [shape = 'u32[]', space=smem, size = 0x4, offset = 0x4, fixed_abs, tag = 'smem constant byte address 0x4 - core index']
  #allocation1 [shape = 'u32[144,128]{1,0:T(1,128)}', space=vmem, size = 0x12000, scoped, tag = 'internal scratch']
  #allocation2 [shape = 'f32[16,128]{1,0:T(8,128)}', space=vmem, size = 0x2000, scoped, tag = 'scratch operand']
  %s0 = inlined_call_operand.vmem [shape: bf16[16,32], index: 0, kind: input, shape index: {}]
  %s1 = inlined_call_operand.vmem [shape: bf16[32,128], index: 1, kind: input, shape index: {}]
  %s2 = inlined_call_operand.vmem [shape: f32[1,128], index: 2, kind: input, shape index: {}]
  %s3 = inlined_call_operand.vmem [shape: f32[16,128], index: 3, kind: output, shape index: {}]
  %s4 = sld [smem:[#allocation0]]
  $region30: #{sparse_attention_forward.1} parent=0
    _
  %s6 = ssub.s32 1, %s4
  %s7 = scalar_select 0, %s6, %s4
  // Predicated region
  $region2: #{sparse_attention_forward.1} parent=0 // pred_check
    _
  $region3: #{sparse_attention_forward.1} parent=0 // pred_check_branch
    %9 = sbr.rel (0) target = $region5
  $region4: #{sparse_attention_forward.1} parent=0 // pred_region
    _
  $region5: #{sparse_attention_forward.1} parent=0 // pred_fallthru
    _
  // Predicated region
  $region6: #{sparse_attention_forward.1} parent=0 // pred_check
    _
  $region7: #{sparse_attention_forward.1} parent=0 // pred_check_branch
    %11 = sbr.rel (0) target = $region9
  $region8: #{sparse_attention_forward.1} parent=0 // pred_region
    _
  $region9: #{sparse_attention_forward.1} parent=0 // pred_fallthru
    _
  // Predicated region
  $region10: #{sparse_attention_forward.1} parent=0 // pred_check
    _
  $region11: #{sparse_attention_forward.1} parent=0 // pred_check_branch
    %13 = sbr.rel (0) target = $region13
  $region12: #{sparse_attention_forward.1} parent=0 // pred_region
    _
  $region13: #{sparse_attention_forward.1} parent=0 // pred_fallthru
    _
  %p15 = scmp.eq.s32.totalorder 0, 0
  // Predicated region
  $region14: #{sparse_attention_forward.1} parent=0 // pred_check
    %p16 = pneg %p15
  $region15: #{sparse_attention_forward.1} parent=0 // pred_check_branch
    %18 = sbr.rel (%p16) target = $region17
  $region16: #{sparse_attention_forward.1} parent=0 // pred_region
    %19 = vst [vmem:[#allocation2] sm:$0xff] 0.0
    %20 = vst [vmem:[#allocation2 + $0x8] sm:$0xff] 0.0
  $region17: #{sparse_attention_forward.1} parent=0 // pred_fallthru
    _
  %v21 = vld [vmem:[#allocation2] sm:$0xff]
  %v22 = vld [vmem:[#allocation2 + $0x8] sm:$0xff]
  %v23 = vld [vmem:[%s0] sm:$0xf]
  %v24 = vld [vmem:[%s0 + $0x4] sm:$0xf]
  %v25 = vld [vmem:[%s1] sm:$0xf]
  %v26 = vld [vmem:[%s1 + $0x4] sm:$0xf]
  %v27 = vld [vmem:[%s1 + $0x8] sm:$0xf]
  %v28 = vld [vmem:[%s1 + $0xc] sm:$0xf]
  %v31 = vunpack.c.l.b16 %v23
  %v32 = vunpack.c.l.b16 %v24
  %v33 = vpack.c.b16 %v32, %v31
  %v38 = vunpack.c.l.b16 %v25
  %v39 = vunpack.c.l.b16 %v26
  %v40 = vunpack.c.l.b16 %v27
  %v41 = vunpack.c.l.b16 %v28
  %v42 = vpack.c.b16 %v39, %v38
  %v43 = vpack.c.b16 %v41, %v40
  %vm46 = vcmask 261120
  %v48 = vsel %vm46, %v33, 0
  %50 = vmatprep.subr.bf16.mxu0 0
  %51 = vmatpush1.bf16.msra.mxu0 0
  %52 = vmatprep.subr.bf16.mxu0 0
  %53 = vmatpush1.bf16.msra.mxu0 0
  %54 = vmatprep.subr.bf16.mxu0 0
  %55 = vmatpush1.bf16.msra.mxu0 0
  %56 = vmatprep.subr.bf16.mxu0 0
  %57 = vmatpush1.bf16.msra.mxu0 0
  %58 = vmatprep.subr.bf16.mxu0 0
  %59 = vmatpush1.bf16.msra.mxu0 0
  %60 = vmatprep.subr.bf16.mxu0 0
  %61 = vmatpush1.bf16.msra.mxu0 0
  %62 = vmatprep.subr.bf16.mxu0 0
  %63 = vmatpush1.bf16.msra.mxu0 %v43
  %64 = vmatprep.subr.bf16.mxu0 0
  %65 = vmatpush1.bf16.msra.mxu0 %v42
  %66 = vmatprep.subr.bf16.mxu0 0
  %67 = vmatpush2.bf16.msra.mxu0 0
  %68 = vmatprep.subr.bf16.mxu0 0
  %69 = vmatpush2.bf16.msra.mxu0 0
  %70 = vmatprep.subr.bf16.mxu0 0
  %71 = vmatpush2.bf16.msra.mxu0 0
  %72 = vmatprep.subr.bf16.mxu0 0
  %73 = vmatpush2.bf16.msra.mxu0 0
  %74 = vmatprep.subr.bf16.mxu0 0
  %75 = vmatpush2.bf16.msra.mxu0 0
  %76 = vmatprep.subr.bf16.mxu0 0
  %77 = vmatpush2.bf16.msra.mxu0 0
  %78 = vmatprep.subr.bf16.mxu0 0
  %79 = vmatpush2.bf16.msra.mxu0 0
  %80 = vmatprep.subr.bf16.mxu0 0
  %81 = vmatpush2.bf16.msra.mxu0 0
  %82 = vmatprep.mubr.bf16.mxu0 0
  %83 = vmatmul.mubr.bf16.gmra.mxu0 %v48
  %v84 = vpop.f32.mrf.mxu0
  %v85 = vadd.f32 0.0, %v84
  %v86 = vpop.f32.mrf.mxu0
  %v87 = vpop.f32.mrf.mxu0
  %v88 = vadd.f32 0.0, %v87
  %v89 = vpop.f32.mrf.mxu0
  %90 = vdwg.mxu0
  %v91 = vadd.f32 %v21, %v85
  %v92 = vadd.f32 %v22, %v88
  %93 = vst [vmem:[#allocation2] sm:$0xff] %v91
  %94 = vst [vmem:[#allocation2 + $0x8] sm:$0xff] %v92
  // Predicated region
  $region18: #{sparse_attention_forward.1} parent=0 // pred_check
    %p95 = pneg %p15
  $region19: #{sparse_attention_forward.1} parent=0 // pred_check_branch
    %97 = sbr.rel (%p95) target = $region21
  $region20: #{sparse_attention_forward.1} parent=0 // pred_region
    %v98 = vld [vmem:[#allocation2] sm:$0xff]
    %v99 = vld [vmem:[#allocation2 + $0x8] sm:$0xff]
    %v100 = vld [vmem:[%s2] sm:$0x1]
    %v102 = vlaneseq
    %v103 = vshrl.u32 %v102, 7
    %v104 = vsub.s32 0, %v103
    %v105 = vrot.slane %v100, %v104
    %v107 = vadd.f32 %v98, %v105
    %v108 = vadd.f32 %v99, %v105
    %109 = vst [vmem:[%s3] sm:$0xff] %v107
    %110 = vst [vmem:[%s3 + $0x8] sm:$0xff] %v108
  $region21: #{sparse_attention_forward.1} parent=0 // pred_fallthru
    _
  // Predicated region
  $region22: #{sparse_attention_forward.1} parent=0 // pred_check
    _
  $region23: #{sparse_attention_forward.1} parent=0 // pred_check_branch
    %112 = sbr.rel (0) target = $region25
  $region24: #{sparse_attention_forward.1} parent=0 // pred_region
    _
  $region25: #{sparse_attention_forward.1} parent=0 // pred_fallthru
    _
  // Predicated region
  $region26: #{sparse_attention_forward.1} parent=0 // pred_check
    _
  $region27: #{sparse_attention_forward.1} parent=0 // pred_check_branch
    %114 = sbr.rel (0) target = $region29
  $region28: #{sparse_attention_forward.1} parent=0 // pred_region
    _
  $region29: #{sparse_attention_forward.1} parent=0 // pred_fallthru
    _

</llo_original>
